<compile_context>
chip_gen: v7x
topology: tpu7x:2x2x1
jax: 0.10.0
libtpu: 0.0.40
codegen_flags: <defaults>
</compile_context>

<pallas_src>
import functools

import jax
import jax.numpy as jnp
from jax.experimental import pallas as pl
from jax.experimental.pallas import tpu as pltpu

LANE = 128     # TPU vreg lane width
SUBLANE = 8    # TPU vreg sublane width


def _round_up(n, m):
    return ((n + m - 1) // m) * m


def mlp_kernel(x_ref, w1_ref, w2_ref, w3_ref, w4_ref, bias_ref, o_ref):
    # Entire fused 4-layer MLP hot path runs in-kernel on the MXU/VPU.
    # MXU operands are in the weights' storage dtype (bf16 by default, already
    # matched by x); accumulate / bias add / ReLU stay in fp32.
    hid = w1_ref.shape[1]
    out_p = w4_ref.shape[1]
    cdt = w1_ref.dtype

    h = jnp.dot(x_ref[...], w1_ref[...], preferred_element_type=jnp.float32)
    h = jnp.maximum(h + bias_ref[0:1, :hid], 0.0).astype(cdt)

    h = jnp.dot(h, w2_ref[...], preferred_element_type=jnp.float32)
    h = jnp.maximum(h + bias_ref[1:2, :hid], 0.0).astype(cdt)

    h = jnp.dot(h, w3_ref[...], preferred_element_type=jnp.float32)
    h = jnp.maximum(h + bias_ref[2:3, :hid], 0.0).astype(cdt)

    o = jnp.dot(h, w4_ref[...], preferred_element_type=jnp.float32)
    o_ref[...] = (o + bias_ref[3:4, :out_p]).astype(o_ref.dtype)


def prepare_params(w1, b1, w2, b2, w3, b3, w4, b4, *, use_bf16=True):
    """One-time, x-independent weight prep (padding + compute-dtype cast).

    Call this ONCE and reuse the result across forwards; it is deliberately
    kept out of mlp_forward so repeated inference never re-pads/re-casts the
    weights.
    """
    in_dim, hid = w1.shape
    out_dim = w4.shape[1]
    in_p = _round_up(in_dim, LANE)
    out_p = _round_up(out_dim, LANE)
    cdt = jnp.bfloat16 if use_bf16 else jnp.float32

    # Lane-dense zero padding of the narrow feature dims + bf16 cast (halves
    # weight DMA bytes).
    w1_p = jnp.zeros((in_p, hid), cdt).at[:in_dim, :].set(w1.astype(cdt))
    w2_c = w2.astype(cdt)
    w3_c = w3.astype(cdt)
    w4_p = jnp.zeros((hid, out_p), cdt).at[:, :out_dim].set(w4.astype(cdt))

    # Pack all four biases into one sublane-padded fp32 block: rows 0..3 hold
    # b1, b2, b3, b4 (zero-padded).  One DMA instead of four tiny ones.
    width = max(hid, out_p)
    bias_pack = jnp.zeros((SUBLANE, width), jnp.float32)
    bias_pack = bias_pack.at[0, :hid].set(jnp.reshape(b1, (-1,)))
    bias_pack = bias_pack.at[1, :hid].set(jnp.reshape(b2, (-1,)))
    bias_pack = bias_pack.at[2, :hid].set(jnp.reshape(b3, (-1,)))
    bias_pack = bias_pack.at[3, :out_dim].set(jnp.reshape(b4, (-1,)))

    return w1_p, w2_c, w3_c, w4_p, bias_pack


def mlp_forward(x, w1_p, w2_c, w3_c, w4_p, bias_pack, *, out_dim, tile_b=256):
    """Forward pass; takes params produced by prepare_params()."""
    B, in_dim = x.shape
    in_p, hid = w1_p.shape
    out_p = w4_p.shape[1]
    cdt = w1_p.dtype

    # Whole (padded) batch in a single grid step when it fits under tile_b;
    # otherwise tile at tile_b (=256 -> 256-wide MXU M dim filled on v6e/v7x,
    # and n_tiles > 1 lets the batch axis shard across v7x's two TCs).
    tile_b = min(tile_b, _round_up(B, SUBLANE))
    B_p = _round_up(B, tile_b)
    n_tiles = B_p // tile_b

    # Only x-dependent work stays on the hot path: cast to the compute dtype
    # and zero-pad to the lane-dense padded feature width / batch tile.
    x_p = jnp.zeros((B_p, in_p), cdt).at[:B, :in_dim].set(x.astype(cdt))

    full = lambda shape: pl.BlockSpec(shape, lambda i: (0, 0))

    flops = 2 * B_p * (in_p * hid + 2 * hid * hid + hid * out_p)
    bytes_accessed = (
        x_p.size * x_p.dtype.itemsize
        + sum(a.size * a.dtype.itemsize
              for a in (w1_p, w2_c, w3_c, w4_p, bias_pack))
        + B_p * out_p * 4)

    out_padded = pl.pallas_call(
        mlp_kernel,
        out_shape=jax.ShapeDtypeStruct((B_p, out_p), jnp.float32),
        grid_spec=pltpu.PrefetchScalarGridSpec(
            num_scalar_prefetch=0,
            grid=(n_tiles,),
            in_specs=[
                pl.BlockSpec((tile_b, in_p), lambda i: (i, 0)),  # x: batch-tiled
                full(w1_p.shape),                                # layer 1 weights
                full(w2_c.shape),                                # layer 2 weights
                full(w3_c.shape),                                # layer 3 weights
                full(w4_p.shape),                                # layer 4 weights
                full(bias_pack.shape),                           # packed biases
            ],
            out_specs=pl.BlockSpec((tile_b, out_p), lambda i: (i, 0)),
        ),
        compiler_params=pltpu.CompilerParams(
            dimension_semantics=(("parallel",) if n_tiles > 1
                                 else ("arbitrary",))),
        cost_estimate=pl.CostEstimate(flops=flops, transcendentals=0,
                                      bytes_accessed=bytes_accessed),
    )(x_p, w1_p, w2_c, w3_c, w4_p, bias_pack)

    # Slice the lane-dense padded result back to the true shape.
    return out_padded[:B, :out_dim]


def init_linear(key, in_dim, out_dim):
    # Deterministic init mimicking PyTorch's U(-1/sqrt(in), 1/sqrt(in)).
    kw, kb = jax.random.split(key)
    bound = 1.0 / jnp.sqrt(jnp.float32(in_dim))
    w = jax.random.uniform(kw, (in_dim, out_dim), jnp.float32, -bound, bound)
    b = jax.random.uniform(kb, (1, out_dim), jnp.float32, -bound, bound)
    return w, b


def reference_forward(x, w1, b1, w2, b2, w3, b3, w4, b4,
                      cast_dtype=jnp.float32):
    def lin(h, w, b):
        return jnp.dot(h.astype(cast_dtype), w.astype(cast_dtype),
                       preferred_element_type=jnp.float32) + b
    h = jnp.maximum(lin(x, w1, b1), 0.0)
    h = jnp.maximum(lin(h, w2, b2), 0.0)
    h = jnp.maximum(lin(h, w3, b3), 0.0)
    return lin(h, w4, b4)


if __name__ == "__main__":
    input_dim, hidden, output_dim = 32, 256, 8
    batch = 16

    key = jax.random.PRNGKey(0)
    kx, k1, k2, k3, k4 = jax.random.split(key, 5)

    x = jax.random.normal(kx, (batch, input_dim), jnp.float32)
    w1, b1 = init_linear(k1, input_dim, hidden)
    w2, b2 = init_linear(k2, hidden, hidden)
    w3, b3 = init_linear(k3, hidden, hidden)
    w4, b4 = init_linear(k4, hidden, output_dim)

    # One-time weight prep (hoisted off the per-call hot path), then a jitted
    # forward that only pads/casts x before the fused Pallas kernel.
    params = prepare_params(w1, b1, w2, b2, w3, b3, w4, b4)
    params = jax.block_until_ready(params)
    fwd = jax.jit(functools.partial(mlp_forward, out_dim=output_dim))

    out = fwd(x, *params)
    out = jax.block_until_ready(out)
    assert out.shape == (batch, output_dim)

    # Second call exercises the cached-params / jitted hot path.
    out2 = jax.block_until_ready(fwd(x, *params))
    assert jnp.allclose(out, out2)

    # Match against a reference with identical bf16 operand casts (tight tol)
    # and the pure-fp32 reference (loose tol, covers bf16 rounding).
    ref_bf16 = reference_forward(x, w1, b1, w2, b2, w3, b3, w4, b4,
                                 cast_dtype=jnp.bfloat16)
    ref_f32 = reference_forward(x, w1, b1, w2, b2, w3, b3, w4, b4)
    assert jnp.allclose(out, ref_bf16, atol=2e-2, rtol=2e-2), \
        "mismatch vs bf16-cast JAX reference"
    assert jnp.allclose(out, ref_f32, atol=8e-2, rtol=8e-2), \
        "mismatch vs fp32 JAX reference"

    print("KERNEL_OK")
</pallas_src>

<mosaic_0001>
module attributes {stable_mosaic.version = 11 : i64} {
  func.func @mlp_kernel(%arg0: i32, %arg1: memref<16x128xbf16, #tpu.memory_space<vmem>>, %arg2: memref<128x256xbf16, #tpu.memory_space<vmem>>, %arg3: memref<256x256xbf16, #tpu.memory_space<vmem>>, %arg4: memref<256x256xbf16, #tpu.memory_space<vmem>>, %arg5: memref<256x128xbf16, #tpu.memory_space<vmem>>, %arg6: memref<8x256xf32, #tpu.memory_space<vmem>>, %arg7: memref<16x128xf32, #tpu.memory_space<vmem>>) attributes {dimension_semantics = [#tpu.dimension_semantics<arbitrary>], iteration_bounds = array<i64: 1>, scalar_prefetch = 0 : i64, scratch_operands = 0 : i64, tpu.core_type = #tpu.core_type<tc>, window_params = [{transform_indices = @transform_0, window_bounds = array<i64: 16, 128>}, {pipeline_mode = #tpu.pipeline_mode<synchronous>, transform_indices = @transform_1, window_bounds = array<i64: 128, 256>}, {pipeline_mode = #tpu.pipeline_mode<synchronous>, transform_indices = @transform_2, window_bounds = array<i64: 256, 256>}, {pipeline_mode = #tpu.pipeline_mode<synchronous>, transform_indices = @transform_3, window_bounds = array<i64: 256, 256>}, {pipeline_mode = #tpu.pipeline_mode<synchronous>, transform_indices = @transform_4, window_bounds = array<i64: 256, 128>}, {pipeline_mode = #tpu.pipeline_mode<synchronous>, transform_indices = @transform_5, window_bounds = array<i64: 8, 256>}, {transform_indices = @transform_6, window_bounds = array<i64: 16, 128>}]} {
    %c0 = arith.constant 0 : index
    %c0_0 = arith.constant 0 : index
    %0 = vector.load %arg1[%c0, %c0_0] : memref<16x128xbf16, #tpu.memory_space<vmem>>, vector<16x128xbf16>
    %c0_1 = arith.constant 0 : index
    %c0_2 = arith.constant 0 : index
    %1 = vector.load %arg2[%c0_1, %c0_2] : memref<128x256xbf16, #tpu.memory_space<vmem>>, vector<128x256xbf16>
    %cst = arith.constant dense<0.000000e+00> : vector<16x256xf32>
    %2 = tpu.matmul %0, %1, %cst {dimension_numbers = #tpu.dot_dimension_numbers<[1], [0], [0], [1], [0, 0, 1, 1], [], []>} : vector<16x128xbf16>, vector<128x256xbf16>, vector<16x256xf32> -> vector<16x256xf32>
    %c0_3 = arith.constant 0 : index
    %c0_4 = arith.constant 0 : index
    %3 = vector.load %arg6[%c0_3, %c0_4] : memref<8x256xf32, #tpu.memory_space<vmem>>, vector<1x256xf32>
    %4 = vector.broadcast %3 : vector<1x256xf32> to vector<16x256xf32>
    %5 = arith.addf %2, %4 : vector<16x256xf32>
    %cst_5 = arith.constant 0.000000e+00 : f32
    %6 = vector.broadcast %cst_5 : f32 to vector<16x256xf32>
    %7 = arith.maximumf %5, %6 : vector<16x256xf32>
    %8 = arith.truncf %7 : vector<16x256xf32> to vector<16x256xbf16>
    %c0_6 = arith.constant 0 : index
    %c0_7 = arith.constant 0 : index
    %9 = vector.load %arg3[%c0_6, %c0_7] : memref<256x256xbf16, #tpu.memory_space<vmem>>, vector<256x256xbf16>
    %cst_8 = arith.constant dense<0.000000e+00> : vector<16x256xf32>
    %10 = tpu.matmul %8, %9, %cst_8 {dimension_numbers = #tpu.dot_dimension_numbers<[1], [0], [0], [1], [0, 0, 1, 1], [], []>} : vector<16x256xbf16>, vector<256x256xbf16>, vector<16x256xf32> -> vector<16x256xf32>
    %c1 = arith.constant 1 : index
    %c0_9 = arith.constant 0 : index
    %11 = vector.load %arg6[%c1, %c0_9] : memref<8x256xf32, #tpu.memory_space<vmem>>, vector<1x256xf32>
    %12 = vector.broadcast %11 : vector<1x256xf32> to vector<16x256xf32>
    %13 = arith.addf %10, %12 : vector<16x256xf32>
    %cst_10 = arith.constant 0.000000e+00 : f32
    %14 = vector.broadcast %cst_10 : f32 to vector<16x256xf32>
    %15 = arith.maximumf %13, %14 : vector<16x256xf32>
    %16 = arith.truncf %15 : vector<16x256xf32> to vector<16x256xbf16>
    %c0_11 = arith.constant 0 : index
    %c0_12 = arith.constant 0 : index
    %17 = vector.load %arg4[%c0_11, %c0_12] : memref<256x256xbf16, #tpu.memory_space<vmem>>, vector<256x256xbf16>
    %cst_13 = arith.constant dense<0.000000e+00> : vector<16x256xf32>
    %18 = tpu.matmul %16, %17, %cst_13 {dimension_numbers = #tpu.dot_dimension_numbers<[1], [0], [0], [1], [0, 0, 1, 1], [], []>} : vector<16x256xbf16>, vector<256x256xbf16>, vector<16x256xf32> -> vector<16x256xf32>
    %c2 = arith.constant 2 : index
    %c0_14 = arith.constant 0 : index
    %19 = vector.load %arg6[%c2, %c0_14] : memref<8x256xf32, #tpu.memory_space<vmem>>, vector<1x256xf32>
    %20 = vector.broadcast %19 : vector<1x256xf32> to vector<16x256xf32>
    %21 = arith.addf %18, %20 : vector<16x256xf32>
    %cst_15 = arith.constant 0.000000e+00 : f32
    %22 = vector.broadcast %cst_15 : f32 to vector<16x256xf32>
    %23 = arith.maximumf %21, %22 : vector<16x256xf32>
    %24 = arith.truncf %23 : vector<16x256xf32> to vector<16x256xbf16>
    %c0_16 = arith.constant 0 : index
    %c0_17 = arith.constant 0 : index
    %25 = vector.load %arg5[%c0_16, %c0_17] : memref<256x128xbf16, #tpu.memory_space<vmem>>, vector<256x128xbf16>
    %cst_18 = arith.constant dense<0.000000e+00> : vector<16x128xf32>
    %26 = tpu.matmul %24, %25, %cst_18 {dimension_numbers = #tpu.dot_dimension_numbers<[1], [0], [0], [1], [0, 0, 1, 1], [], []>} : vector<16x256xbf16>, vector<256x128xbf16>, vector<16x128xf32> -> vector<16x128xf32>
    %c3 = arith.constant 3 : index
    %c0_19 = arith.constant 0 : index
    %27 = vector.load %arg6[%c3, %c0_19] : memref<8x256xf32, #tpu.memory_space<vmem>>, vector<1x128xf32>
    %28 = vector.broadcast %27 : vector<1x128xf32> to vector<16x128xf32>
    %29 = arith.addf %26, %28 : vector<16x128xf32>
    %c0_20 = arith.constant 0 : index
    %c0_21 = arith.constant 0 : index
    %30 = vector.load %arg7[%c0_20, %c0_21] : memref<16x128xf32, #tpu.memory_space<vmem>>, vector<16x128xf32>
    tpu.vector_store %arg7[%c0_20, %c0_21], %29 {strides = array<i32>} : memref<16x128xf32, #tpu.memory_space<vmem>>, vector<16x128xf32>,
    return
  }
  func.func @transform_0(%arg0: i32) -> (i32, i32) {
    %c0_i32 = arith.constant 0 : i32
    %c0_i32_0 = arith.constant 0 : i32
    return %arg0, %c0_i32 : i32, i32
  }
  func.func @transform_1(%arg0: i32) -> (i32, i32) {
    %c0_i32 = arith.constant 0 : i32
    %c0_i32_0 = arith.constant 0 : i32
    %c0_i32_1 = arith.constant 0 : i32
    return %c0_i32, %c0_i32_0 : i32, i32
  }
  func.func @transform_2(%arg0: i32) -> (i32, i32) {
    %c0_i32 = arith.constant 0 : i32
    %c0_i32_0 = arith.constant 0 : i32
    %c0_i32_1 = arith.constant 0 : i32
    return %c0_i32, %c0_i32_0 : i32, i32
  }
  func.func @transform_3(%arg0: i32) -> (i32, i32) {
    %c0_i32 = arith.constant 0 : i32
    %c0_i32_0 = arith.constant 0 : i32
    %c0_i32_1 = arith.constant 0 : i32
    return %c0_i32, %c0_i32_0 : i32, i32
  }
  func.func @transform_4(%arg0: i32) -> (i32, i32) {
    %c0_i32 = arith.constant 0 : i32
    %c0_i32_0 = arith.constant 0 : i32
    %c0_i32_1 = arith.constant 0 : i32
    return %c0_i32, %c0_i32_0 : i32, i32
  }
  func.func @transform_5(%arg0: i32) -> (i32, i32) {
    %c0_i32 = arith.constant 0 : i32
    %c0_i32_0 = arith.constant 0 : i32
    %c0_i32_1 = arith.constant 0 : i32
    return %c0_i32, %c0_i32_0 : i32, i32
  }
  func.func @transform_6(%arg0: i32) -> (i32, i32) {
    %c0_i32 = arith.constant 0 : i32
    %c0_i32_0 = arith.constant 0 : i32
    return %arg0, %c0_i32 : i32, i32
  }
}

</mosaic_0001>

<llo_original>
// kernel: mlp_forward.1
$region0: #{mlp_forward.1}
  #allocation0 [shape = 'u32[]', space=smem, size = 0x4, offset = 0x4, fixed_abs, tag = 'smem constant byte address 0x4 - core index']
  #allocation1 [shape = 'u32[144,128]{1,0:T(1,128)}', space=vmem, size = 0x12000, scoped, tag = 'internal scratch']
  %s0 = inlined_call_operand.vmem [shape: bf16[16,128], index: 0, kind: input, shape index: {}]
  %s1 = inlined_call_operand.hbm [shape: bf16[128,256], index: 1, kind: input, shape index: {}]
  %s2 = inlined_call_operand.hbm [shape: bf16[256,256], index: 2, kind: input, shape index: {}]
  %s3 = inlined_call_operand.hbm [shape: bf16[256,256], index: 3, kind: input, shape index: {}]
  %s4 = inlined_call_operand.hbm [shape: bf16[256,128], index: 4, kind: input, shape index: {}]
  %s5 = inlined_call_operand.vmem [shape: f32[8,256], index: 5, kind: input, shape index: {}]
  %s6 = inlined_call_operand.vmem [shape: f32[16,128], index: 6, kind: output, shape index: {}]
  %s7 = sld [smem:[#allocation0]]
  $region50: #{mlp_forward.1} parent=0
    _
  %s9 = ssub.s32 1, %s7
  %s10 = scalar_select 0, %s9, %s7
  $region1: #{mlp_forward.1} parent=0
    #allocation2 [shape = 'u8[65536]{0}', space=vmem, size = 0x10000, scoped, tag = 'input window, operand 1, single buffered']
    #allocation3 [shape = 's32[1]{0}', space=sflag, size = 0x4, scoped, tag = 'scoped memory for mlp_forward.1']
    #allocation4 [shape = 'u8[131072]{0}', space=vmem, size = 0x20000, scoped, tag = 'input window, operand 2, single buffered']
    #allocation5 [shape = 's32[1]{0}', space=sflag, size = 0x4, scoped, tag = 'scoped memory for mlp_forward.1']
    #allocation6 [shape = 'u8[131072]{0}', space=vmem, size = 0x20000, scoped, tag = 'input window, operand 3, single buffered']
    #allocation7 [shape = 'u8[65536]{0}', space=vmem, size = 0x10000, scoped, tag = 'input window, operand 4, single buffered']
    #allocation8 [shape = 's32[1]{0}', space=sflag, size = 0x4, scoped, tag = 'scoped memory for mlp_forward.1']
    %11 = vsyncpa [#allocation3], 0
    %12 = vsyncpa [#allocation5], 0
    %13 = vsyncpa [#allocation8], 0
    // Predicated region
    $region2: #{mlp_forward.1} parent=1 // pred_check
      _
    $region3: #{mlp_forward.1} parent=1 // pred_check_branch
      %15 = sbr.rel (0) target = $region5
    $region4: #{mlp_forward.1} parent=1 // pred_region
      _
    $region5: #{mlp_forward.1} parent=1 // pred_fallthru
      _
    // Predicated region
    $region6: #{mlp_forward.1} parent=1 // pred_check
      _
    $region7: #{mlp_forward.1} parent=1 // pred_check_branch
      %17 = sbr.rel (0) target = $region9
    $region8: #{mlp_forward.1} parent=1 // pred_region
      %s19 = ssub.s32 2048, 2048
      %20 = vsyncadd [#allocation3], %s19
      %s21 = sshll.u32 [#allocation2], 4
      %s22 = int_to_ptr.vmem [resolvable:$true] %s21
      %27 = dma.hbm_to_vmem [thread:$0]  %s1, 2048, %s22, [#allocation3], 128, 128, 8
    $region9: #{mlp_forward.1} parent=1 // pred_fallthru
      _
    // Predicated region
    $region10: #{mlp_forward.1} parent=1 // pred_check
      _
    $region11: #{mlp_forward.1} parent=1 // pred_check_branch
      %29 = sbr.rel (0) target = $region13
    $region12: #{mlp_forward.1} parent=1 // pred_region
      %s31 = ssub.s32 4096, 4096
      %32 = vsyncadd [#allocation5], %s31
      %s33 = sshll.u32 [#allocation4], 4
      %s34 = int_to_ptr.vmem [resolvable:$true] %s33
      %39 = dma.hbm_to_vmem [thread:$0]  %s2, 4096, %s34, [#allocation5], 128, 128, 8
    $region13: #{mlp_forward.1} parent=1 // pred_fallthru
      _
    // Predicated region
    $region14: #{mlp_forward.1} parent=1 // pred_check
      _
    $region15: #{mlp_forward.1} parent=1 // pred_check_branch
      %41 = sbr.rel (0) target = $region17
    $region16: #{mlp_forward.1} parent=1 // pred_region
      %s43 = ssub.s32 4096, 4096
      %44 = vsyncadd [#allocation5], %s43
      %s45 = sshll.u32 [#allocation6], 4
      %s46 = int_to_ptr.vmem [resolvable:$true] %s45
      %51 = dma.hbm_to_vmem [thread:$0]  %s3, 4096, %s46, [#allocation5], 128, 128, 8
    $region17: #{mlp_forward.1} parent=1 // pred_fallthru
      _
    // Predicated region
    $region18: #{mlp_forward.1} parent=1 // pred_check
      _
    $region19: #{mlp_forward.1} parent=1 // pred_check_branch
      %53 = sbr.rel (0) target = $region21
    $region20: #{mlp_forward.1} parent=1 // pred_region
      %s55 = ssub.s32 2048, 2048
      %56 = vsyncadd [#allocation8], %s55
      %s57 = sshll.u32 [#allocation7], 4
      %s58 = int_to_ptr.vmem [resolvable:$true] %s57
      %63 = dma.hbm_to_vmem [thread:$0]  %s4, 2048, %s58, [#allocation8], 64, 64, 4
    $region21: #{mlp_forward.1} parent=1 // pred_fallthru
      _
    // Predicated region
    $region22: #{mlp_forward.1} parent=1 // pred_check
      _
    $region23: #{mlp_forward.1} parent=1 // pred_check_branch
      %65 = sbr.rel (0) target = $region25
    $region24: #{mlp_forward.1} parent=1 // pred_region
      _
    $region25: #{mlp_forward.1} parent=1 // pred_fallthru
      _
    // Predicated region
    $region26: #{mlp_forward.1} parent=1 // pred_check
      _
    $region27: #{mlp_forward.1} parent=1 // pred_check_branch
      %67 = sbr.rel (0) target = $region29
    $region28: #{mlp_forward.1} parent=1 // pred_region
      %68 = dma.done [#allocation3], 2048
    $region29: #{mlp_forward.1} parent=1 // pred_fallthru
      _
    // Predicated region
    $region30: #{mlp_forward.1} parent=1 // pred_check
      _
    $region31: #{mlp_forward.1} parent=1 // pred_check_branch
      %70 = sbr.rel (0) target = $region33
    $region32: #{mlp_forward.1} parent=1 // pred_region
      %71 = dma.done [#allocation5], 4096
    $region33: #{mlp_forward.1} parent=1 // pred_fallthru
      _
    // Predicated region
    $region34: #{mlp_forward.1} parent=1 // pred_check
      _
    $region35: #{mlp_forward.1} parent=1 // pred_check_branch
      %73 = sbr.rel (0) target = $region37
    $region36: #{mlp_forward.1} parent=1 // pred_region
      %74 = dma.done [#allocation5], 4096
    $region37: #{mlp_forward.1} parent=1 // pred_fallthru
      _
    // Predicated region
    $region38: #{mlp_forward.1} parent=1 // pred_check
      _
    $region39: #{mlp_forward.1} parent=1 // pred_check_branch
      %76 = sbr.rel (0) target = $region41
    $region40: #{mlp_forward.1} parent=1 // pred_region
      %77 = dma.done [#allocation8], 2048
    $region41: #{mlp_forward.1} parent=1 // pred_fallthru
      _
    %v79 = vld [vmem:[%s0] sm:$0xf]
    %v80 = vld [vmem:[%s0 + $0x4] sm:$0xf]
    %v81 = vld [vmem:[#allocation2] sm:$0xff]
    %v82 = vld [vmem:[#allocation2 + $0x8] sm:$0xff]
    %v83 = vld [vmem:[#allocation2 + $0x10] sm:$0xff]
    %v84 = vld [vmem:[#allocation2 + $0x18] sm:$0xff]
    %v85 = vld [vmem:[#allocation2 + $0x20] sm:$0xff]
    %v86 = vld [vmem:[#allocation2 + $0x28] sm:$0xff]
    %v87 = vld [vmem:[#allocation2 + $0x30] sm:$0xff]
    %v88 = vld [vmem:[#allocation2 + $0x38] sm:$0xff]
    %v89 = vld [vmem:[#allocation2 + $0x40] sm:$0xff]
    %v90 = vld [vmem:[#allocation2 + $0x48] sm:$0xff]
    %v91 = vld [vmem:[#allocation2 + $0x50] sm:$0xff]
    %v92 = vld [vmem:[#allocation2 + $0x58] sm:$0xff]
    %v93 = vld [vmem:[#allocation2 + $0x60] sm:$0xff]
    %v94 = vld [vmem:[#allocation2 + $0x68] sm:$0xff]
    %v95 = vld [vmem:[#allocation2 + $0x70] sm:$0xff]
    %v96 = vld [vmem:[#allocation2 + $0x78] sm:$0xff]
    %v97 = vld [vmem:[%s5] ss:$8 sm:$0x3]
    %v99 = vlaneseq
    %v100 = vshrl.u32 %v99, 7
    %v101 = vsub.s32 0, %v100
    %v102 = vrot.slane %v97, %v101
    %v103 = vlaneseq
    %v104 = vshrl.u32 %v103, 7
    %v105 = vsub.s32 1, %v104
    %v106 = vrot.slane %v97, %v105
    %v111 = vunpack.c.l.b16 %v79
    %v112 = vunpack.c.l.b16 %v80
    %v113 = vpack.c.b16 %v112, %v111
    %v131 = vunpack.c.l.b16 %v81
    %v132 = vunpack.c.h.b16 %v81
    %v133 = vunpack.c.l.b16 %v82
    %v134 = vunpack.c.h.b16 %v82
    %v135 = vunpack.c.l.b16 %v83
    %v136 = vunpack.c.h.b16 %v83
    %v137 = vunpack.c.l.b16 %v84
    %v138 = vunpack.c.h.b16 %v84
    %v139 = vunpack.c.l.b16 %v85
    %v140 = vunpack.c.h.b16 %v85
    %v141 = vunpack.c.l.b16 %v86
    %v142 = vunpack.c.h.b16 %v86
    %v143 = vunpack.c.l.b16 %v87
    %v144 = vunpack.c.h.b16 %v87
    %v145 = vunpack.c.l.b16 %v88
    %v146 = vunpack.c.h.b16 %v88
    %v147 = vunpack.c.l.b16 %v89
    %v148 = vunpack.c.h.b16 %v89
    %v149 = vunpack.c.l.b16 %v90
    %v150 = vunpack.c.h.b16 %v90
    %v151 = vunpack.c.l.b16 %v91
    %v152 = vunpack.c.h.b16 %v91
    %v153 = vunpack.c.l.b16 %v92
    %v154 = vunpack.c.h.b16 %v92
    %v155 = vunpack.c.l.b16 %v93
    %v156 = vunpack.c.h.b16 %v93
    %v157 = vunpack.c.l.b16 %v94
    %v158 = vunpack.c.h.b16 %v94
    %v159 = vunpack.c.l.b16 %v95
    %v160 = vunpack.c.h.b16 %v95
    %v161 = vunpack.c.l.b16 %v96
    %v162 = vunpack.c.h.b16 %v96
    %v163 = vpack.c.b16 %v133, %v131
    %v164 = vpack.c.b16 %v134, %v132
    %v165 = vpack.c.b16 %v137, %v135
    %v166 = vpack.c.b16 %v138, %v136
    %v167 = vpack.c.b16 %v141, %v139
    %v168 = vpack.c.b16 %v142, %v140
    %v169 = vpack.c.b16 %v145, %v143
    %v170 = vpack.c.b16 %v146, %v144
    %v171 = vpack.c.b16 %v149, %v147
    %v172 = vpack.c.b16 %v150, %v148
    %v173 = vpack.c.b16 %v153, %v151
    %v174 = vpack.c.b16 %v154, %v152
    %v175 = vpack.c.b16 %v157, %v155
    %v176 = vpack.c.b16 %v158, %v156
    %v177 = vpack.c.b16 %v161, %v159
    %v178 = vpack.c.b16 %v162, %v160
    %195 = vmatprep.subr.bf16.mxu0 %v164
    %196 = vmatpush1.bf16.msra.mxu0 %v163
    %197 = vmatprep.subr.bf16.mxu0 %v166
    %198 = vmatpush1.bf16.msra.mxu0 %v165
    %199 = vmatprep.subr.bf16.mxu0 %v168
    %200 = vmatpush1.bf16.msra.mxu0 %v167
    %201 = vmatprep.subr.bf16.mxu0 %v170
    %202 = vmatpush1.bf16.msra.mxu0 %v169
    %203 = vmatprep.subr.bf16.mxu0 %v172
    %204 = vmatpush1.bf16.msra.mxu0 %v171
    %205 = vmatprep.subr.bf16.mxu0 %v174
    %206 = vmatpush1.bf16.msra.mxu0 %v173
    %207 = vmatprep.subr.bf16.mxu0 %v176
    %208 = vmatpush1.bf16.msra.mxu0 %v175
    %209 = vmatprep.subr.bf16.mxu0 %v178
    %210 = vmatpush1.bf16.msra.mxu0 %v177
    %211 = vmatprep.subr.bf16.mxu0 0
    %212 = vmatpush1.bf16.msra.mxu0 0
    %213 = vmatprep.subr.bf16.mxu0 0
    %214 = vmatpush1.bf16.msra.mxu0 0
    %215 = vmatprep.subr.bf16.mxu0 0
    %216 = vmatpush1.bf16.msra.mxu0 0
    %217 = vmatprep.subr.bf16.mxu0 0
    %218 = vmatpush1.bf16.msra.mxu0 0
    %219 = vmatprep.subr.bf16.mxu0 0
    %220 = vmatpush1.bf16.msra.mxu0 0
    %221 = vmatprep.subr.bf16.mxu0 0
    %222 = vmatpush1.bf16.msra.mxu0 0
    %223 = vmatprep.subr.bf16.mxu0 0
    %224 = vmatpush1.bf16.msra.mxu0 0
    %225 = vmatprep.subr.bf16.mxu0 0
    %226 = vmatpush1.bf16.msra.mxu0 0
    %227 = vmatprep.mubr.bf16.mxu0 0
    %228 = vmatmul.mubr.bf16.gmra.mrb[0].mxu0 %v113
    %v229 = vpop.f32.mrb[0].mxu0
    %v230 = vadd.f32 %v102, %v229
    %v231 = vpop.f32.mrb[0].mxu0
    %v232 = vadd.f32 %v106, %v231
    %v233 = vpop.f32.mrb[0].mxu0
    %v234 = vadd.f32 %v102, %v233
    %v235 = vpop.f32.mrb[0].mxu0
    %v236 = vadd.f32 %v106, %v235
    %237 = vdwg.mxu0
    %v238 = vmax.f32 %v230, 0.0
    %v239 = vmax.f32 %v232, 0.0
    %v240 = vmax.f32 %v234, 0.0
    %v241 = vmax.f32 %v236, 0.0
    %v242 = vpack.c.bf16 %v240, %v238
    %v243 = vpack.c.bf16 %v241, %v239
    %v244 = vld [vmem:[#allocation4] sm:$0xff]
    %v245 = vld [vmem:[#allocation4 + $0x8] sm:$0xff]
    %v246 = vld [vmem:[#allocation4 + $0x10] sm:$0xff]
    %v247 = vld [vmem:[#allocation4 + $0x18] sm:$0xff]
    %v248 = vld [vmem:[#allocation4 + $0x20] sm:$0xff]
    %v249 = vld [vmem:[#allocation4 + $0x28] sm:$0xff]
    %v250 = vld [vmem:[#allocation4 + $0x30] sm:$0xff]
    %v251 = vld [vmem:[#allocation4 + $0x38] sm:$0xff]
    %v252 = vld [vmem:[#allocation4 + $0x40] sm:$0xff]
    %v253 = vld [vmem:[#allocation4 + $0x48] sm:$0xff]
    %v254 = vld [vmem:[#allocation4 + $0x50] sm:$0xff]
    %v255 = vld [vmem:[#allocation4 + $0x58] sm:$0xff]
    %v256 = vld [vmem:[#allocation4 + $0x60] sm:$0xff]
    %v257 = vld [vmem:[#allocation4 + $0x68] sm:$0xff]
    %v258 = vld [vmem:[#allocation4 + $0x70] sm:$0xff]
    %v259 = vld [vmem:[#allocation4 + $0x78] sm:$0xff]
    %v260 = vld [vmem:[#allocation4 + $0x80] sm:$0xff]
    %v261 = vld [vmem:[#allocation4 + $0x88] sm:$0xff]
    %v262 = vld [vmem:[#allocation4 + $0x90] sm:$0xff]
    %v263 = vld [vmem:[#allocation4 + $0x98] sm:$0xff]
    %v264 = vld [vmem:[#allocation4 + $0xa0] sm:$0xff]
    %v265 = vld [vmem:[#allocation4 + $0xa8] sm:$0xff]
    %v266 = vld [vmem:[#allocation4 + $0xb0] sm:$0xff]
    %v267 = vld [vmem:[#allocation4 + $0xb8] sm:$0xff]
    %v268 = vld [vmem:[#allocation4 + $0xc0] sm:$0xff]
    %v269 = vld [vmem:[#allocation4 + $0xc8] sm:$0xff]
    %v270 = vld [vmem:[#allocation4 + $0xd0] sm:$0xff]
    %v271 = vld [vmem:[#allocation4 + $0xd8] sm:$0xff]
    %v272 = vld [vmem:[#allocation4 + $0xe0] sm:$0xff]
    %v273 = vld [vmem:[#allocation4 + $0xe8] sm:$0xff]
    %v274 = vld [vmem:[#allocation4 + $0xf0] sm:$0xff]
    %v275 = vld [vmem:[#allocation4 + $0xf8] sm:$0xff]
    %s276 = scalar_lea.vmem %s5, 1
    %v277 = vld [vmem:[%s276] ss:$8 sm:$0x3]
    %v279 = vlaneseq
    %v280 = vshrl.u32 %v279, 7
    %v281 = vsub.s32 0, %v280
    %v282 = vrot.slane %v277, %v281
    %v283 = vlaneseq
    %v284 = vshrl.u32 %v283, 7
    %v285 = vsub.s32 1, %v284
    %v286 = vrot.slane %v277, %v285
    %v321 = vunpack.c.l.b16 %v244
    %v322 = vunpack.c.h.b16 %v244
    %v323 = vunpack.c.l.b16 %v245
    %v324 = vunpack.c.h.b16 %v245
    %v325 = vunpack.c.l.b16 %v246
    %v326 = vunpack.c.h.b16 %v246
    %v327 = vunpack.c.l.b16 %v247
    %v328 = vunpack.c.h.b16 %v247
    %v329 = vunpack.c.l.b16 %v248
    %v330 = vunpack.c.h.b16 %v248
    %v331 = vunpack.c.l.b16 %v249
    %v332 = vunpack.c.h.b16 %v249
    %v333 = vunpack.c.l.b16 %v250
    %v334 = vunpack.c.h.b16 %v250
    %v335 = vunpack.c.l.b16 %v251
    %v336 = vunpack.c.h.b16 %v251
    %v337 = vunpack.c.l.b16 %v252
    %v338 = vunpack.c.h.b16 %v252
    %v339 = vunpack.c.l.b16 %v253
    %v340 = vunpack.c.h.b16 %v253
    %v341 = vunpack.c.l.b16 %v254
    %v342 = vunpack.c.h.b16 %v254
    %v343 = vunpack.c.l.b16 %v255
    %v344 = vunpack.c.h.b16 %v255
    %v345 = vunpack.c.l.b16 %v256
    %v346 = vunpack.c.h.b16 %v256
    %v347 = vunpack.c.l.b16 %v257
    %v348 = vunpack.c.h.b16 %v257
    %v349 = vunpack.c.l.b16 %v258
    %v350 = vunpack.c.h.b16 %v258
    %v351 = vunpack.c.l.b16 %v259
    %v352 = vunpack.c.h.b16 %v259
    %v353 = vunpack.c.l.b16 %v260
    %v354 = vunpack.c.h.b16 %v260
    %v355 = vunpack.c.l.b16 %v261
    %v356 = vunpack.c.h.b16 %v261
    %v357 = vunpack.c.l.b16 %v262
    %v358 = vunpack.c.h.b16 %v262
    %v359 = vunpack.c.l.b16 %v263
    %v360 = vunpack.c.h.b16 %v263
    %v361 = vunpack.c.l.b16 %v264
    %v362 = vunpack.c.h.b16 %v264
    %v363 = vunpack.c.l.b16 %v265
    %v364 = vunpack.c.h.b16 %v265
    %v365 = vunpack.c.l.b16 %v266
    %v366 = vunpack.c.h.b16 %v266
    %v367 = vunpack.c.l.b16 %v267
    %v368 = vunpack.c.h.b16 %v267
    %v369 = vunpack.c.l.b16 %v268
    %v370 = vunpack.c.h.b16 %v268
    %v371 = vunpack.c.l.b16 %v269
    %v372 = vunpack.c.h.b16 %v269
    %v373 = vunpack.c.l.b16 %v270
    %v374 = vunpack.c.h.b16 %v270
    %v375 = vunpack.c.l.b16 %v271
    %v376 = vunpack.c.h.b16 %v271
    %v377 = vunpack.c.l.b16 %v272
    %v378 = vunpack.c.h.b16 %v272
    %v379 = vunpack.c.l.b16 %v273
    %v380 = vunpack.c.h.b16 %v273
    %v381 = vunpack.c.l.b16 %v274
    %v382 = vunpack.c.h.b16 %v274
    %v383 = vunpack.c.l.b16 %v275
    %v384 = vunpack.c.h.b16 %v275
    %v385 = vpack.c.b16 %v323, %v321
    %v386 = vpack.c.b16 %v324, %v322
    %v387 = vpack.c.b16 %v327, %v325
    %v388 = vpack.c.b16 %v328, %v326
    %v389 = vpack.c.b16 %v331, %v329
    %v390 = vpack.c.b16 %v332, %v330
    %v391 = vpack.c.b16 %v335, %v333
    %v392 = vpack.c.b16 %v336, %v334
    %v393 = vpack.c.b16 %v339, %v337
    %v394 = vpack.c.b16 %v340, %v338
    %v395 = vpack.c.b16 %v343, %v341
    %v396 = vpack.c.b16 %v344, %v342
    %v397 = vpack.c.b16 %v347, %v345
    %v398 = vpack.c.b16 %v348, %v346
    %v399 = vpack.c.b16 %v351, %v349
    %v400 = vpack.c.b16 %v352, %v350
    %v401 = vpack.c.b16 %v355, %v353
    %v402 = vpack.c.b16 %v356, %v354
    %v403 = vpack.c.b16 %v359, %v357
    %v404 = vpack.c.b16 %v360, %v358
    %v405 = vpack.c.b16 %v363, %v361
    %v406 = vpack.c.b16 %v364, %v362
    %v407 = vpack.c.b16 %v367, %v365
    %v408 = vpack.c.b16 %v368, %v366
    %v409 = vpack.c.b16 %v371, %v369
    %v410 = vpack.c.b16 %v372, %v370
    %v411 = vpack.c.b16 %v375, %v373
    %v412 = vpack.c.b16 %v376, %v374
    %v413 = vpack.c.b16 %v379, %v377
    %v414 = vpack.c.b16 %v380, %v378
    %v415 = vpack.c.b16 %v383, %v381
    %v416 = vpack.c.b16 %v384, %v382
    %449 = vmatprep.subr.bf16.mxu0 %v386
    %450 = vmatpush1.bf16.msra.mxu0 %v385
    %451 = vmatprep.subr.bf16.mxu0 %v388
    %452 = vmatpush1.bf16.msra.mxu0 %v387
    %453 = vmatprep.subr.bf16.mxu0 %v390
    %454 = vmatpush1.bf16.msra.mxu0 %v389
    %455 = vmatprep.subr.bf16.mxu0 %v392
    %456 = vmatpush1.bf16.msra.mxu0 %v391
    %457 = vmatprep.subr.bf16.mxu0 %v394
    %458 = vmatpush1.bf16.msra.mxu0 %v393
    %459 = vmatprep.subr.bf16.mxu0 %v396
    %460 = vmatpush1.bf16.msra.mxu0 %v395
    %461 = vmatprep.subr.bf16.mxu0 %v398
    %462 = vmatpush1.bf16.msra.mxu0 %v397
    %463 = vmatprep.subr.bf16.mxu0 %v400
    %464 = vmatpush1.bf16.msra.mxu0 %v399
    %465 = vmatprep.subr.bf16.mxu0 %v402
    %466 = vmatpush1.bf16.msra.mxu0 %v401
    %467 = vmatprep.subr.bf16.mxu0 %v404
    %468 = vmatpush1.bf16.msra.mxu0 %v403
    %469 = vmatprep.subr.bf16.mxu0 %v406
    %470 = vmatpush1.bf16.msra.mxu0 %v405
    %471 = vmatprep.subr.bf16.mxu0 %v408
    %472 = vmatpush1.bf16.msra.mxu0 %v407
    %473 = vmatprep.subr.bf16.mxu0 %v410
    %474 = vmatpush1.bf16.msra.mxu0 %v409
    %475 = vmatprep.subr.bf16.mxu0 %v412
    %476 = vmatpush1.bf16.msra.mxu0 %v411
    %477 = vmatprep.subr.bf16.mxu0 %v414
    %478 = vmatpush1.bf16.msra.mxu0 %v413
    %479 = vmatprep.subr.bf16.mxu0 %v416
    %480 = vmatpush1.bf16.msra.mxu0 %v415
    %481 = vmatprep.mubr.bf16.mxu0 %v243
    %482 = vmatmul.mubr.bf16.gmra.mrb[0].mxu0 %v242
    %v483 = vpop.f32.mrb[0].mxu0
    %v484 = vadd.f32 %v282, %v483
    %v485 = vpop.f32.mrb[0].mxu0
    %v486 = vadd.f32 %v286, %v485
    %v487 = vpop.f32.mrb[0].mxu0
    %v488 = vadd.f32 %v282, %v487
    %v489 = vpop.f32.mrb[0].mxu0
    %v490 = vadd.f32 %v286, %v489
    %491 = vdwg.mxu0
    %v492 = vmax.f32 %v484, 0.0
    %v493 = vmax.f32 %v486, 0.0
    %v494 = vmax.f32 %v488, 0.0
    %v495 = vmax.f32 %v490, 0.0
    %v496 = vpack.c.bf16 %v494, %v492
    %v497 = vpack.c.bf16 %v495, %v493
    %v498 = vld [vmem:[#allocation6] sm:$0xff]
    %v499 = vld [vmem:[#allocation6 + $0x8] sm:$0xff]
    %v500 = vld [vmem:[#allocation6 + $0x10] sm:$0xff]
    %v501 = vld [vmem:[#allocation6 + $0x18] sm:$0xff]
    %v502 = vld [vmem:[#allocation6 + $0x20] sm:$0xff]
    %v503 = vld [vmem:[#allocation6 + $0x28] sm:$0xff]
    %v504 = vld [vmem:[#allocation6 + $0x30] sm:$0xff]
    %v505 = vld [vmem:[#allocation6 + $0x38] sm:$0xff]
    %v506 = vld [vmem:[#allocation6 + $0x40] sm:$0xff]
    %v507 = vld [vmem:[#allocation6 + $0x48] sm:$0xff]
    %v508 = vld [vmem:[#allocation6 + $0x50] sm:$0xff]
    %v509 = vld [vmem:[#allocation6 + $0x58] sm:$0xff]
    %v510 = vld [vmem:[#allocation6 + $0x60] sm:$0xff]
    %v511 = vld [vmem:[#allocation6 + $0x68] sm:$0xff]
    %v512 = vld [vmem:[#allocation6 + $0x70] sm:$0xff]
    %v513 = vld [vmem:[#allocation6 + $0x78] sm:$0xff]
    %v514 = vld [vmem:[#allocation6 + $0x80] sm:$0xff]
    %v515 = vld [vmem:[#allocation6 + $0x88] sm:$0xff]
    %v516 = vld [vmem:[#allocation6 + $0x90] sm:$0xff]
    %v517 = vld [vmem:[#allocation6 + $0x98] sm:$0xff]
    %v518 = vld [vmem:[#allocation6 + $0xa0] sm:$0xff]
    %v519 = vld [vmem:[#allocation6 + $0xa8] sm:$0xff]
    %v520 = vld [vmem:[#allocation6 + $0xb0] sm:$0xff]
    %v521 = vld [vmem:[#allocation6 + $0xb8] sm:$0xff]
    %v522 = vld [vmem:[#allocation6 + $0xc0] sm:$0xff]
    %v523 = vld [vmem:[#allocation6 + $0xc8] sm:$0xff]
    %v524 = vld [vmem:[#allocation6 + $0xd0] sm:$0xff]
    %v525 = vld [vmem:[#allocation6 + $0xd8] sm:$0xff]
    %v526 = vld [vmem:[#allocation6 + $0xe0] sm:$0xff]
    %v527 = vld [vmem:[#allocation6 + $0xe8] sm:$0xff]
    %v528 = vld [vmem:[#allocation6 + $0xf0] sm:$0xff]
    %v529 = vld [vmem:[#allocation6 + $0xf8] sm:$0xff]
    %s530 = scalar_lea.vmem %s5, 2
    %v531 = vld [vmem:[%s530] ss:$8 sm:$0x3]
    %v533 = vlaneseq
    %v534 = vshrl.u32 %v533, 7
    %v535 = vsub.s32 0, %v534
    %v536 = vrot.slane %v531, %v535
    %v537 = vlaneseq
    %v538 = vshrl.u32 %v537, 7
    %v539 = vsub.s32 1, %v538
    %v540 = vrot.slane %v531, %v539
    %v575 = vunpack.c.l.b16 %v498
    %v576 = vunpack.c.h.b16 %v498
    %v577 = vunpack.c.l.b16 %v499
    %v578 = vunpack.c.h.b16 %v499
    %v579 = vunpack.c.l.b16 %v500
    %v580 = vunpack.c.h.b16 %v500
    %v581 = vunpack.c.l.b16 %v501
    %v582 = vunpack.c.h.b16 %v501
    %v583 = vunpack.c.l.b16 %v502
    %v584 = vunpack.c.h.b16 %v502
    %v585 = vunpack.c.l.b16 %v503
    %v586 = vunpack.c.h.b16 %v503
    %v587 = vunpack.c.l.b16 %v504
    %v588 = vunpack.c.h.b16 %v504
    %v589 = vunpack.c.l.b16 %v505
    %v590 = vunpack.c.h.b16 %v505
    %v591 = vunpack.c.l.b16 %v506
    %v592 = vunpack.c.h.b16 %v506
    %v593 = vunpack.c.l.b16 %v507
    %v594 = vunpack.c.h.b16 %v507
    %v595 = vunpack.c.l.b16 %v508
    %v596 = vunpack.c.h.b16 %v508
    %v597 = vunpack.c.l.b16 %v509
    %v598 = vunpack.c.h.b16 %v509
    %v599 = vunpack.c.l.b16 %v510
    %v600 = vunpack.c.h.b16 %v510
    %v601 = vunpack.c.l.b16 %v511
    %v602 = vunpack.c.h.b16 %v511
    %v603 = vunpack.c.l.b16 %v512
    %v604 = vunpack.c.h.b16 %v512
    %v605 = vunpack.c.l.b16 %v513
    %v606 = vunpack.c.h.b16 %v513
    %v607 = vunpack.c.l.b16 %v514
    %v608 = vunpack.c.h.b16 %v514
    %v609 = vunpack.c.l.b16 %v515
    %v610 = vunpack.c.h.b16 %v515
    %v611 = vunpack.c.l.b16 %v516
    %v612 = vunpack.c.h.b16 %v516
    %v613 = vunpack.c.l.b16 %v517
    %v614 = vunpack.c.h.b16 %v517
    %v615 = vunpack.c.l.b16 %v518
    %v616 = vunpack.c.h.b16 %v518
    %v617 = vunpack.c.l.b16 %v519
    %v618 = vunpack.c.h.b16 %v519
    %v619 = vunpack.c.l.b16 %v520
    %v620 = vunpack.c.h.b16 %v520
    %v621 = vunpack.c.l.b16 %v521
    %v622 = vunpack.c.h.b16 %v521
    %v623 = vunpack.c.l.b16 %v522
    %v624 = vunpack.c.h.b16 %v522
    %v625 = vunpack.c.l.b16 %v523
    %v626 = vunpack.c.h.b16 %v523
    %v627 = vunpack.c.l.b16 %v524
    %v628 = vunpack.c.h.b16 %v524
    %v629 = vunpack.c.l.b16 %v525
    %v630 = vunpack.c.h.b16 %v525
    %v631 = vunpack.c.l.b16 %v526
    %v632 = vunpack.c.h.b16 %v526
    %v633 = vunpack.c.l.b16 %v527
    %v634 = vunpack.c.h.b16 %v527
    %v635 = vunpack.c.l.b16 %v528
    %v636 = vunpack.c.h.b16 %v528
    %v637 = vunpack.c.l.b16 %v529
    %v638 = vunpack.c.h.b16 %v529
    %v639 = vpack.c.b16 %v577, %v575
    %v640 = vpack.c.b16 %v578, %v576
    %v641 = vpack.c.b16 %v581, %v579
    %v642 = vpack.c.b16 %v582, %v580
    %v643 = vpack.c.b16 %v585, %v583
    %v644 = vpack.c.b16 %v586, %v584
    %v645 = vpack.c.b16 %v589, %v587
    %v646 = vpack.c.b16 %v590, %v588
    %v647 = vpack.c.b16 %v593, %v591
    %v648 = vpack.c.b16 %v594, %v592
    %v649 = vpack.c.b16 %v597, %v595
    %v650 = vpack.c.b16 %v598, %v596
    %v651 = vpack.c.b16 %v601, %v599
    %v652 = vpack.c.b16 %v602, %v600
    %v653 = vpack.c.b16 %v605, %v603
    %v654 = vpack.c.b16 %v606, %v604
    %v655 = vpack.c.b16 %v609, %v607
    %v656 = vpack.c.b16 %v610, %v608
    %v657 = vpack.c.b16 %v613, %v611
    %v658 = vpack.c.b16 %v614, %v612
    %v659 = vpack.c.b16 %v617, %v615
    %v660 = vpack.c.b16 %v618, %v616
    %v661 = vpack.c.b16 %v621, %v619
    %v662 = vpack.c.b16 %v622, %v620
    %v663 = vpack.c.b16 %v625, %v623
    %v664 = vpack.c.b16 %v626, %v624
    %v665 = vpack.c.b16 %v629, %v627
    %v666 = vpack.c.b16 %v630, %v628
    %v667 = vpack.c.b16 %v633, %v631
    %v668 = vpack.c.b16 %v634, %v632
    %v669 = vpack.c.b16 %v637, %v635
    %v670 = vpack.c.b16 %v638, %v636
    %703 = vmatprep.subr.bf16.mxu0 %v640
    %704 = vmatpush1.bf16.msra.mxu0 %v639
    %705 = vmatprep.subr.bf16.mxu0 %v642
    %706 = vmatpush1.bf16.msra.mxu0 %v641
    %707 = vmatprep.subr.bf16.mxu0 %v644
    %708 = vmatpush1.bf16.msra.mxu0 %v643
    %709 = vmatprep.subr.bf16.mxu0 %v646
    %710 = vmatpush1.bf16.msra.mxu0 %v645
    %711 = vmatprep.subr.bf16.mxu0 %v648
    %712 = vmatpush1.bf16.msra.mxu0 %v647
    %713 = vmatprep.subr.bf16.mxu0 %v650
    %714 = vmatpush1.bf16.msra.mxu0 %v649
    %715 = vmatprep.subr.bf16.mxu0 %v652
    %716 = vmatpush1.bf16.msra.mxu0 %v651
    %717 = vmatprep.subr.bf16.mxu0 %v654
    %718 = vmatpush1.bf16.msra.mxu0 %v653
    %719 = vmatprep.subr.bf16.mxu0 %v656
    %720 = vmatpush1.bf16.msra.mxu0 %v655
    %721 = vmatprep.subr.bf16.mxu0 %v658
    %722 = vmatpush1.bf16.msra.mxu0 %v657
    %723 = vmatprep.subr.bf16.mxu0 %v660
    %724 = vmatpush1.bf16.msra.mxu0 %v659
    %725 = vmatprep.subr.bf16.mxu0 %v662
    %726 = vmatpush1.bf16.msra.mxu0 %v661
    %727 = vmatprep.subr.bf16.mxu0 %v664
    %728 = vmatpush1.bf16.msra.mxu0 %v663
    %729 = vmatprep.subr.bf16.mxu0 %v666
    %730 = vmatpush1.bf16.msra.mxu0 %v665
    %731 = vmatprep.subr.bf16.mxu0 %v668
    %732 = vmatpush1.bf16.msra.mxu0 %v667
    %733 = vmatprep.subr.bf16.mxu0 %v670
    %734 = vmatpush1.bf16.msra.mxu0 %v669
    %735 = vmatprep.mubr.bf16.mxu0 %v497
    %736 = vmatmul.mubr.bf16.gmra.mrb[0].mxu0 %v496
    %v737 = vpop.f32.mrb[0].mxu0
    %v738 = vadd.f32 %v536, %v737
    %v739 = vpop.f32.mrb[0].mxu0
    %v740 = vadd.f32 %v540, %v739
    %v741 = vpop.f32.mrb[0].mxu0
    %v742 = vadd.f32 %v536, %v741
    %v743 = vpop.f32.mrb[0].mxu0
    %v744 = vadd.f32 %v540, %v743
    %745 = vdwg.mxu0
    %v746 = vmax.f32 %v738, 0.0
    %v747 = vmax.f32 %v740, 0.0
    %v748 = vmax.f32 %v742, 0.0
    %v749 = vmax.f32 %v744, 0.0
    %v750 = vpack.c.bf16 %v748, %v746
    %v751 = vpack.c.bf16 %v749, %v747
    %v752 = vld [vmem:[#allocation7] sm:$0xf]
    %v753 = vld [vmem:[#allocation7 + $0x4] sm:$0xf]
    %v754 = vld [vmem:[#allocation7 + $0x8] sm:$0xf]
    %v755 = vld [vmem:[#allocation7 + $0xc] sm:$0xf]
    %v756 = vld [vmem:[#allocation7 + $0x10] sm:$0xf]
    %v757 = vld [vmem:[#allocation7 + $0x14] sm:$0xf]
    %v758 = vld [vmem:[#allocation7 + $0x18] sm:$0xf]
    %v759 = vld [vmem:[#allocation7 + $0x1c] sm:$0xf]
    %v760 = vld [vmem:[#allocation7 + $0x20] sm:$0xf]
    %v761 = vld [vmem:[#allocation7 + $0x24] sm:$0xf]
    %v762 = vld [vmem:[#allocation7 + $0x28] sm:$0xf]
    %v763 = vld [vmem:[#allocation7 + $0x2c] sm:$0xf]
    %v764 = vld [vmem:[#allocation7 + $0x30] sm:$0xf]
    %v765 = vld [vmem:[#allocation7 + $0x34] sm:$0xf]
    %v766 = vld [vmem:[#allocation7 + $0x38] sm:$0xf]
    %v767 = vld [vmem:[#allocation7 + $0x3c] sm:$0xf]
    %v768 = vld [vmem:[#allocation7 + $0x40] sm:$0xf]
    %v769 = vld [vmem:[#allocation7 + $0x44] sm:$0xf]
    %v770 = vld [vmem:[#allocation7 + $0x48] sm:$0xf]
    %v771 = vld [vmem:[#allocation7 + $0x4c] sm:$0xf]
    %v772 = vld [vmem:[#allocation7 + $0x50] sm:$0xf]
    %v773 = vld [vmem:[#allocation7 + $0x54] sm:$0xf]
    %v774 = vld [vmem:[#allocation7 + $0x58] sm:$0xf]
    %v775 = vld [vmem:[#allocation7 + $0x5c] sm:$0xf]
    %v776 = vld [vmem:[#allocation7 + $0x60] sm:$0xf]
    %v777 = vld [vmem:[#allocation7 + $0x64] sm:$0xf]
    %v778 = vld [vmem:[#allocation7 + $0x68] sm:$0xf]
    %v779 = vld [vmem:[#allocation7 + $0x6c] sm:$0xf]
    %v780 = vld [vmem:[#allocation7 + $0x70] sm:$0xf]
    %v781 = vld [vmem:[#allocation7 + $0x74] sm:$0xf]
    %v782 = vld [vmem:[#allocation7 + $0x78] sm:$0xf]
    %v783 = vld [vmem:[#allocation7 + $0x7c] sm:$0xf]
    %v784 = vld [vmem:[%s5 + $0x3] ss:$0 sm:$0xff]
    %v817 = vunpack.c.l.b16 %v752
    %v818 = vunpack.c.l.b16 %v753
    %v819 = vunpack.c.l.b16 %v754
    %v820 = vunpack.c.l.b16 %v755
    %v821 = vunpack.c.l.b16 %v756
    %v822 = vunpack.c.l.b16 %v757
    %v823 = vunpack.c.l.b16 %v758
    %v824 = vunpack.c.l.b16 %v759
    %v825 = vunpack.c.l.b16 %v760
    %v826 = vunpack.c.l.b16 %v761
    %v827 = vunpack.c.l.b16 %v762
    %v828 = vunpack.c.l.b16 %v763
    %v829 = vunpack.c.l.b16 %v764
    %v830 = vunpack.c.l.b16 %v765
    %v831 = vunpack.c.l.b16 %v766
    %v832 = vunpack.c.l.b16 %v767
    %v833 = vunpack.c.l.b16 %v768
    %v834 = vunpack.c.l.b16 %v769
    %v835 = vunpack.c.l.b16 %v770
    %v836 = vunpack.c.l.b16 %v771
    %v837 = vunpack.c.l.b16 %v772
    %v838 = vunpack.c.l.b16 %v773
    %v839 = vunpack.c.l.b16 %v774
    %v840 = vunpack.c.l.b16 %v775
    %v841 = vunpack.c.l.b16 %v776
    %v842 = vunpack.c.l.b16 %v777
    %v843 = vunpack.c.l.b16 %v778
    %v844 = vunpack.c.l.b16 %v779
    %v845 = vunpack.c.l.b16 %v780
    %v846 = vunpack.c.l.b16 %v781
    %v847 = vunpack.c.l.b16 %v782
    %v848 = vunpack.c.l.b16 %v783
    %v849 = vpack.c.b16 %v818, %v817
    %v850 = vpack.c.b16 %v820, %v819
    %v851 = vpack.c.b16 %v822, %v821
    %v852 = vpack.c.b16 %v824, %v823
    %v853 = vpack.c.b16 %v826, %v825
    %v854 = vpack.c.b16 %v828, %v827
    %v855 = vpack.c.b16 %v830, %v829
    %v856 = vpack.c.b16 %v832, %v831
    %v857 = vpack.c.b16 %v834, %v833
    %v858 = vpack.c.b16 %v836, %v835
    %v859 = vpack.c.b16 %v838, %v837
    %v860 = vpack.c.b16 %v840, %v839
    %v861 = vpack.c.b16 %v842, %v841
    %v862 = vpack.c.b16 %v844, %v843
    %v863 = vpack.c.b16 %v846, %v845
    %v864 = vpack.c.b16 %v848, %v847
    %881 = vmatprep.subr.bf16.mxu0 0
    %882 = vmatpush1.bf16.msra.mxu0 %v849
    %883 = vmatprep.subr.bf16.mxu0 0
    %884 = vmatpush1.bf16.msra.mxu0 %v850
    %885 = vmatprep.subr.bf16.mxu0 0
    %886 = vmatpush1.bf16.msra.mxu0 %v851
    %887 = vmatprep.subr.bf16.mxu0 0
    %888 = vmatpush1.bf16.msra.mxu0 %v852
    %889 = vmatprep.subr.bf16.mxu0 0
    %890 = vmatpush1.bf16.msra.mxu0 %v853
    %891 = vmatprep.subr.bf16.mxu0 0
    %892 = vmatpush1.bf16.msra.mxu0 %v854
    %893 = vmatprep.subr.bf16.mxu0 0
    %894 = vmatpush1.bf16.msra.mxu0 %v855
    %895 = vmatprep.subr.bf16.mxu0 0
    %896 = vmatpush1.bf16.msra.mxu0 %v856
    %897 = vmatprep.subr.bf16.mxu0 0
    %898 = vmatpush1.bf16.msra.mxu0 %v857
    %899 = vmatprep.subr.bf16.mxu0 0
    %900 = vmatpush1.bf16.msra.mxu0 %v858
    %901 = vmatprep.subr.bf16.mxu0 0
    %902 = vmatpush1.bf16.msra.mxu0 %v859
    %903 = vmatprep.subr.bf16.mxu0 0
    %904 = vmatpush1.bf16.msra.mxu0 %v860
    %905 = vmatprep.subr.bf16.mxu0 0
    %906 = vmatpush1.bf16.msra.mxu0 %v861
    %907 = vmatprep.subr.bf16.mxu0 0
    %908 = vmatpush1.bf16.msra.mxu0 %v862
    %909 = vmatprep.subr.bf16.mxu0 0
    %910 = vmatpush1.bf16.msra.mxu0 %v863
    %911 = vmatprep.subr.bf16.mxu0 0
    %912 = vmatpush1.bf16.msra.mxu0 %v864
    %913 = vmatprep.mubr.bf16.mxu0 %v751
    %914 = vmatmul.mubr.bf16.gmra.mrb[0].mxu0 %v750
    %v915 = vpop.f32.mrb[0].mxu0
    %v916 = vadd.f32 %v784, %v915
    %v917 = vpop.f32.mrb[0].mxu0
    %v918 = vpop.f32.mrb[0].mxu0
    %v919 = vadd.f32 %v784, %v918
    %v920 = vpop.f32.mrb[0].mxu0
    %921 = vdwg.mxu0
    %922 = vst [vmem:[%s6] sm:$0xff] %v916
    %923 = vst [vmem:[%s6 + $0x8] sm:$0xff] %v919
    // Predicated region
    $region42: #{mlp_forward.1} parent=1 // pred_check
      _
    $region43: #{mlp_forward.1} parent=1 // pred_check_branch
      %925 = sbr.rel (0) target = $region45
    $region44: #{mlp_forward.1} parent=1 // pred_region
      _
    $region45: #{mlp_forward.1} parent=1 // pred_fallthru
      _
    // Predicated region
    $region46: #{mlp_forward.1} parent=1 // pred_check
      _
    $region47: #{mlp_forward.1} parent=1 // pred_check_branch
      %927 = sbr.rel (0) target = $region49
    $region48: #{mlp_forward.1} parent=1 // pred_region
      _
    $region49: #{mlp_forward.1} parent=1 // pred_fallthru
      _
    %928 = vsyncpa [#allocation3], 1
    %929 = vsyncpa [#allocation5], 1
    %930 = vsyncpa [#allocation8], 1

</llo_original>
